<compile_context>
chip_gen: v5e
topology: v5e:2x2
jax: 0.10.0
libtpu: 0.0.40
codegen_flags: <defaults>
</compile_context>

<pallas_src>
import functools

import jax
import jax.numpy as jnp
from jax import lax
from jax.experimental import pallas as pl
from jax.experimental.pallas import tpu as pltpu

OUT_FEATS = 3          # real fc1 output width
OUT_PAD = 128          # lane-dense padded fc1 output width
PSSM_N = 21            # pssm feature count
SEQ_COL = 31           # lane of the fused input block holding the integer residue id
ONEHOT_OFF = 32        # one-hot region occupies lanes [32, 52)
FC0_K = 64             # fused fc0 contraction width
MAX_ROW_TILE = 512     # cap on rows per grid step (>=512-row tiles ~ HBM roofline)
VMEM_BUDGET = 48 * 1024 * 1024   # stay well under v7x's 64 MiB per TensorCore


def _mlp_kernel(x_ref, w0_ref, b0_ref, we_ref, be_ref, w1_ref, b1_ref, o_ref,
                *, n_layers):
    # Hoist biases once (JAX does not CSE broadcast_in_dim).
    b0 = b0_ref[...]                       # (1, H)       f32
    be = be_ref[...]                       # (1, H)       f32
    b1 = b1_ref[...]                       # (1, OUT_PAD) f32

    rt = x_ref.shape[0]

    # ---- fc0: single fused MXU pass --------------------------------------------------
    # x lanes: [0,21) pssm | [21,31) zero | 31 seq id | [32,52) one-hot | [52,64) zero.
    # Weight rows matching the zero / seq-id lanes are zero, so only the one-hot region
    # has to be materialised here (iota-compare + select; pure VPU work, no HBM one-hot).
    x = x_ref[...]                                              # (rt, FC0_K) bf16
    sid = x[:, SEQ_COL:SEQ_COL + 1].astype(jnp.int32)           # (rt, 1) residue id
    lanes = lax.broadcasted_iota(jnp.int32, (rt, FC0_K), 1)
    x = jnp.where(lanes == sid + ONEHOT_OFF, jnp.ones_like(x), x)

    h = jnp.dot(x, w0_ref[...], preferred_element_type=jnp.float32) + b0
    # No activation between fc0 and the encoder (matches the PyTorch module).
    h = h.astype(jnp.bfloat16)             # carry activations in bf16

    # ---- encoder: the SAME (we, be) applied n_layers times, ReLU after each -----------
    # Dropout is identity at eval time.
    # TODO(synk): training-mode dropout would need pltpu.prng_* masking here.
    for _ in range(n_layers):              # static, tiny trip count
        h = jnp.dot(h, we_ref[...], preferred_element_type=jnp.float32) + be
        h = jnp.maximum(h, 0.0)            # bias-add / ReLU stay f32 (v5e-safe)
        h = h.astype(jnp.bfloat16)

    # ---- fc1: lane-dense (rt, 128) result; real 3 columns sliced outside --------------
    out = jnp.dot(h, w1_ref[...], preferred_element_type=jnp.float32) + b1
    o_ref[...] = out.astype(o_ref.dtype)


def prepare_params(params):
    """Pad / cast / fuse the weights ONCE (hoisted out of the per-call forward).

    Returns bf16 MXU weights (f32 biases), hidden padded to a multiple of 128, and the
    fc0 weight fused into a single (64, H) matrix laid out to match the kernel's input:
      rows [0,21)   <- pssm part of fc0          (input lanes 0..20)
      row  31       <- 0 (seq-id carrier lane)
      rows [32,52)  <- one-hot part of fc0       (input lanes 32..51)
      all other rows 0.
    Zero-padding hidden is semantics-preserving: padded lanes stay exactly 0 end to end.
    """
    hidden = params["w0"].shape[1]
    hp = int(pl.cdiv(hidden, 128)) * 128
    bf16 = jnp.bfloat16

    w0 = params["w0"].astype(jnp.float32)                              # (41, hidden)
    w0c = jnp.zeros((FC0_K, hp), jnp.float32)
    w0c = w0c.at[0:PSSM_N, :hidden].set(w0[20:41])                     # pssm rows
    w0c = w0c.at[ONEHOT_OFF:ONEHOT_OFF + 20, :hidden].set(w0[0:20])    # one-hot rows
    b0 = jnp.zeros((1, hp), jnp.float32).at[0, :hidden].set(params["b0"].reshape(-1))
    we = jnp.zeros((hp, hp), jnp.float32).at[:hidden, :hidden].set(params["we"])
    be = jnp.zeros((1, hp), jnp.float32).at[0, :hidden].set(params["be"].reshape(-1))
    w1 = jnp.zeros((hp, OUT_PAD), jnp.float32).at[:hidden, :OUT_FEATS].set(params["w1"])
    b1 = jnp.zeros((1, OUT_PAD), jnp.float32).at[0, :OUT_FEATS].set(params["b1"].reshape(-1))

    return {"w0c": w0c.astype(bf16), "b0": b0,
            "we": we.astype(bf16), "be": be,
            "w1": w1.astype(bf16), "b1": b1}


def baseline_forward(seq, pssm, prepped, *, n_layers, out_dtype=jnp.float32,
                     row_tile=MAX_ROW_TILE):
    """seq: (L, B) int, pssm: (L, B, 21) f32  ->  srf: (L, B, 3) f32.

    `prepped` comes from prepare_params() -- call that once per model, not per forward.
    ('length' from the PyTorch batch dict is unused by the forward pass; omitted.)
    out_dtype=jnp.bfloat16 halves the padded-output HBM writeback (useful for small hidden).
    """
    L, B = seq.shape
    hp = prepped["w0c"].shape[1]
    n = L * B
    bf16 = jnp.bfloat16
    out_isz = jnp.dtype(out_dtype).itemsize

    # ---- row tile from a VMEM budget; keep >= 2 grid steps for v7x's 2 TensorCores ----
    w_bytes = 2 * ((prepped["w0c"].size + prepped["we"].size + prepped["w1"].size) * 2
                   + (prepped["b0"].size + prepped["be"].size + prepped["b1"].size) * 4)
    # per-row VMEM: input block (occupies 128 lanes in VMEM) x2 buffers, output x2 buffers,
    # plus f32 + bf16 activation intermediates held by the compiler.
    per_row = 2 * 128 * 2 + 2 * OUT_PAD * out_isz + hp * 6 + OUT_PAD * 4
    chunks_budget = max(1, int((VMEM_BUDGET - w_bytes) // (per_row * 128)))
    chunks_n = int(pl.cdiv(n, 128))
    chunks_cap = max(1, chunks_n // 2) if chunks_n >= 2 else 1
    rt = 128 * max(1, min(chunks_budget, chunks_cap, max(1, row_tile // 128)))
    n_pad = int(pl.cdiv(n, rt)) * rt

    # ---- fused fc0 input block: [pssm | 0 | seq_id | zeros(one-hot region)], bf16 -----
    pssm_rows = pssm.reshape(n, PSSM_N).astype(bf16)
    seq_rows = seq.reshape(n, 1).astype(bf16)        # ids 0..19 are exact in bf16
    x_rows = jnp.concatenate(
        [pssm_rows,
         jnp.zeros((n, SEQ_COL - PSSM_N), bf16),
         seq_rows,
         jnp.zeros((n, FC0_K - SEQ_COL - 1), bf16)], axis=1)
    x_rows = jnp.pad(x_rows, ((0, n_pad - n), (0, 0)))

    grid = (n_pad // rt,)
    kernel = functools.partial(_mlp_kernel, n_layers=n_layers)

    flops = 2 * n_pad * hp * (FC0_K + n_layers * hp + OUT_PAD)
    bytes_accessed = (n_pad * (FC0_K * 2 + OUT_PAD * out_isz)
                      + (FC0_K * hp + hp * hp + hp * OUT_PAD) * 2
                      + (2 * hp + OUT_PAD) * 4)
    cost = pl.CostEstimate(flops=flops, transcendentals=0,
                           bytes_accessed=bytes_accessed)

    est_vmem = w_bytes + rt * per_row
    vmem_limit = int(min(100 << 20, max(48 << 20, int(1.25 * est_vmem))))

    out = pl.pallas_call(
        kernel,
        out_shape=jax.ShapeDtypeStruct((n_pad, OUT_PAD), out_dtype),
        grid_spec=pltpu.PrefetchScalarGridSpec(
            num_scalar_prefetch=0,
            grid=grid,
            in_specs=[
                pl.BlockSpec((rt, FC0_K), lambda i: (i, 0)),        # fused fc0 input rows
                pl.BlockSpec((FC0_K, hp), lambda i: (0, 0)),        # fused fc0 weight
                pl.BlockSpec((1, hp), lambda i: (0, 0)),            # b0
                pl.BlockSpec((hp, hp), lambda i: (0, 0)),           # encoder weight
                pl.BlockSpec((1, hp), lambda i: (0, 0)),            # encoder bias
                pl.BlockSpec((hp, OUT_PAD), lambda i: (0, 0)),      # fc1 weight (padded)
                pl.BlockSpec((1, OUT_PAD), lambda i: (0, 0)),       # fc1 bias (padded)
            ],
            out_specs=pl.BlockSpec((rt, OUT_PAD), lambda i: (i, 0)),
        ),
        compiler_params=pltpu.CompilerParams(
            dimension_semantics=("parallel",),
            vmem_limit_bytes=vmem_limit),
        cost_estimate=cost,
    )(x_rows, prepped["w0c"], prepped["b0"], prepped["we"], prepped["be"],
      prepped["w1"], prepped["b1"])

    return out[:n, :OUT_FEATS].astype(jnp.float32).reshape(L, B, OUT_FEATS)


def init_params(key, hidden):
    """Deterministic synthetic params (shapes match the PyTorch module).
    Weights stored as (in, out) so the forward computes x @ W + b."""
    k0, k1, k2, k3, k4, k5 = jax.random.split(key, 6)
    s0 = 1.0 / jnp.sqrt(41.0)
    sh = 1.0 / jnp.sqrt(float(hidden))
    return {
        "w0": jax.random.uniform(k0, (41, hidden), jnp.float32, -s0, s0),
        "b0": jax.random.uniform(k1, (1, hidden), jnp.float32, -s0, s0),
        "we": jax.random.uniform(k2, (hidden, hidden), jnp.float32, -sh, sh),
        "be": jax.random.uniform(k3, (1, hidden), jnp.float32, -sh, sh),
        "w1": jax.random.uniform(k4, (hidden, OUT_FEATS), jnp.float32, -sh, sh),
        "b1": jax.random.uniform(k5, (1, OUT_FEATS), jnp.float32, -sh, sh),
    }


def reference_forward(seq, pssm, params, *, n_layers):
    """Pure-JAX reference mirroring the kernel's bf16-matmul / f32-accumulate numerics."""
    bf16 = jnp.bfloat16
    oh = jax.nn.one_hot(seq, 20, dtype=jnp.float32)
    x = jnp.concatenate((oh, pssm), axis=2)
    h = jnp.dot(x.astype(bf16), params["w0"].astype(bf16),
                preferred_element_type=jnp.float32) + params["b0"][0]
    we = params["we"].astype(bf16)
    for _ in range(n_layers):
        h = jnp.maximum(jnp.dot(h.astype(bf16), we,
                                preferred_element_type=jnp.float32)
                        + params["be"][0], 0.0)
    return jnp.dot(h.astype(bf16), params["w1"].astype(bf16),
                   preferred_element_type=jnp.float32) + params["b1"][0]


if __name__ == "__main__":
    L, B, HIDDEN, N_LAYERS = 8, 2, 32, 2
    key = jax.random.PRNGKey(0)
    k_seq, k_pssm, k_param = jax.random.split(key, 3)

    seq = jax.random.randint(k_seq, (L, B), 0, 20, dtype=jnp.int32)
    pssm = jax.random.uniform(k_pssm, (L, B, 21), dtype=jnp.float32)
    params = init_params(k_param, HIDDEN)

    prepped = prepare_params(params)      # once per model; reused across forward calls
    fwd = jax.jit(functools.partial(baseline_forward, n_layers=N_LAYERS))
    srf = jax.block_until_ready(fwd(seq, pssm, prepped))

    ref = reference_forward(seq, pssm, params, n_layers=N_LAYERS)
    assert srf.shape == (L, B, 3)
    assert jnp.allclose(srf, ref, atol=2e-2, rtol=2e-2), float(
        jnp.max(jnp.abs(srf - ref)))

    print("KERNEL_OK")
</pallas_src>

<mosaic_0001>
module attributes {stable_mosaic.version = 11 : i64} {
  func.func @_mlp_kernel(%arg0: i32, %arg1: memref<128x64xbf16, #tpu.memory_space<vmem>>, %arg2: memref<64x128xbf16, #tpu.memory_space<vmem>>, %arg3: memref<1x128xf32, #tpu.memory_space<vmem>>, %arg4: memref<128x128xbf16, #tpu.memory_space<vmem>>, %arg5: memref<1x128xf32, #tpu.memory_space<vmem>>, %arg6: memref<128x128xbf16, #tpu.memory_space<vmem>>, %arg7: memref<1x128xf32, #tpu.memory_space<vmem>>, %arg8: memref<128x128xf32, #tpu.memory_space<vmem>>) attributes {dimension_semantics = [#tpu.dimension_semantics<parallel>], iteration_bounds = array<i64: 1>, scalar_prefetch = 0 : i64, scratch_operands = 0 : i64, tpu.core_type = #tpu.core_type<tc>, window_params = [{transform_indices = @transform_0, window_bounds = array<i64: 128, 64>}, {pipeline_mode = #tpu.pipeline_mode<synchronous>, transform_indices = @transform_1, window_bounds = array<i64: 64, 128>}, {pipeline_mode = #tpu.pipeline_mode<synchronous>, transform_indices = @transform_2, window_bounds = array<i64: 1, 128>}, {pipeline_mode = #tpu.pipeline_mode<synchronous>, transform_indices = @transform_3, window_bounds = array<i64: 128, 128>}, {pipeline_mode = #tpu.pipeline_mode<synchronous>, transform_indices = @transform_4, window_bounds = array<i64: 1, 128>}, {pipeline_mode = #tpu.pipeline_mode<synchronous>, transform_indices = @transform_5, window_bounds = array<i64: 128, 128>}, {pipeline_mode = #tpu.pipeline_mode<synchronous>, transform_indices = @transform_6, window_bounds = array<i64: 1, 128>}, {transform_indices = @transform_7, window_bounds = array<i64: 128, 128>}]} {
    %c0 = arith.constant 0 : index
    %c0_0 = arith.constant 0 : index
    %0 = vector.load %arg3[%c0, %c0_0] : memref<1x128xf32, #tpu.memory_space<vmem>>, vector<1x128xf32>
    %c0_1 = arith.constant 0 : index
    %c0_2 = arith.constant 0 : index
    %1 = vector.load %arg5[%c0_1, %c0_2] : memref<1x128xf32, #tpu.memory_space<vmem>>, vector<1x128xf32>
    %c0_3 = arith.constant 0 : index
    %c0_4 = arith.constant 0 : index
    %2 = vector.load %arg7[%c0_3, %c0_4] : memref<1x128xf32, #tpu.memory_space<vmem>>, vector<1x128xf32>
    %c0_5 = arith.constant 0 : index
    %c0_6 = arith.constant 0 : index
    %3 = vector.load %arg1[%c0_5, %c0_6] : memref<128x64xbf16, #tpu.memory_space<vmem>>, vector<128x64xbf16>
    %4 = vector.extract_strided_slice %3 {offsets = [0, 31], sizes = [128, 1], strides = [1, 1]} : vector<128x64xbf16> to vector<128x1xbf16>
    %5 = arith.fptosi %4 : vector<128x1xbf16> to vector<128x1xi32>
    %6 = tpu.iota {dimensions = array<i32: 1>} : vector<128x64xi32>
    %c32_i32 = arith.constant 32 : i32
    %7 = vector.broadcast %c32_i32 : i32 to vector<128x1xi32>
    %8 = arith.addi %5, %7 : vector<128x1xi32>
    %9 = vector.broadcast %8 : vector<128x1xi32> to vector<128x64xi32>
    %10 = arith.cmpi eq, %6, %9 : vector<128x64xi32>
    %cst = arith.constant 1.000000e+00 : bf16
    %11 = vector.broadcast %cst : bf16 to vector<128x64xbf16>
    %12 = arith.select %10, %11, %3 : vector<128x64xi1>, vector<128x64xbf16>
    %c0_7 = arith.constant 0 : index
    %c0_8 = arith.constant 0 : index
    %13 = vector.load %arg2[%c0_7, %c0_8] : memref<64x128xbf16, #tpu.memory_space<vmem>>, vector<64x128xbf16>
    %cst_9 = arith.constant dense<0.000000e+00> : vector<128x128xf32>
    %14 = tpu.matmul %12, %13, %cst_9 {dimension_numbers = #tpu.dot_dimension_numbers<[1], [0], [0], [1], [0, 0, 1, 1], [], []>} : vector<128x64xbf16>, vector<64x128xbf16>, vector<128x128xf32> -> vector<128x128xf32>
    %15 = vector.broadcast %0 : vector<1x128xf32> to vector<128x128xf32>
    %16 = arith.addf %14, %15 : vector<128x128xf32>
    %17 = arith.truncf %16 : vector<128x128xf32> to vector<128x128xbf16>
    %c0_10 = arith.constant 0 : index
    %c0_11 = arith.constant 0 : index
    %18 = vector.load %arg4[%c0_10, %c0_11] : memref<128x128xbf16, #tpu.memory_space<vmem>>, vector<128x128xbf16>
    %cst_12 = arith.constant dense<0.000000e+00> : vector<128x128xf32>
    %19 = tpu.matmul %17, %18, %cst_12 {dimension_numbers = #tpu.dot_dimension_numbers<[1], [0], [0], [1], [0, 0, 1, 1], [], []>} : vector<128x128xbf16>, vector<128x128xbf16>, vector<128x128xf32> -> vector<128x128xf32>
    %20 = vector.broadcast %1 : vector<1x128xf32> to vector<128x128xf32>
    %21 = arith.addf %19, %20 : vector<128x128xf32>
    %cst_13 = arith.constant 0.000000e+00 : f32
    %22 = vector.broadcast %cst_13 : f32 to vector<128x128xf32>
    %23 = arith.maximumf %21, %22 : vector<128x128xf32>
    %24 = arith.truncf %23 : vector<128x128xf32> to vector<128x128xbf16>
    %c0_14 = arith.constant 0 : index
    %c0_15 = arith.constant 0 : index
    %25 = vector.load %arg4[%c0_14, %c0_15] : memref<128x128xbf16, #tpu.memory_space<vmem>>, vector<128x128xbf16>
    %cst_16 = arith.constant dense<0.000000e+00> : vector<128x128xf32>
    %26 = tpu.matmul %24, %25, %cst_16 {dimension_numbers = #tpu.dot_dimension_numbers<[1], [0], [0], [1], [0, 0, 1, 1], [], []>} : vector<128x128xbf16>, vector<128x128xbf16>, vector<128x128xf32> -> vector<128x128xf32>
    %27 = vector.broadcast %1 : vector<1x128xf32> to vector<128x128xf32>
    %28 = arith.addf %26, %27 : vector<128x128xf32>
    %cst_17 = arith.constant 0.000000e+00 : f32
    %29 = vector.broadcast %cst_17 : f32 to vector<128x128xf32>
    %30 = arith.maximumf %28, %29 : vector<128x128xf32>
    %31 = arith.truncf %30 : vector<128x128xf32> to vector<128x128xbf16>
    %c0_18 = arith.constant 0 : index
    %c0_19 = arith.constant 0 : index
    %32 = vector.load %arg6[%c0_18, %c0_19] : memref<128x128xbf16, #tpu.memory_space<vmem>>, vector<128x128xbf16>
    %cst_20 = arith.constant dense<0.000000e+00> : vector<128x128xf32>
    %33 = tpu.matmul %31, %32, %cst_20 {dimension_numbers = #tpu.dot_dimension_numbers<[1], [0], [0], [1], [0, 0, 1, 1], [], []>} : vector<128x128xbf16>, vector<128x128xbf16>, vector<128x128xf32> -> vector<128x128xf32>
    %34 = vector.broadcast %2 : vector<1x128xf32> to vector<128x128xf32>
    %35 = arith.addf %33, %34 : vector<128x128xf32>
    %c0_21 = arith.constant 0 : index
    %c0_22 = arith.constant 0 : index
    %36 = vector.load %arg8[%c0_21, %c0_22] : memref<128x128xf32, #tpu.memory_space<vmem>>, vector<128x128xf32>
    tpu.vector_store %arg8[%c0_21, %c0_22], %35 {strides = array<i32>} : memref<128x128xf32, #tpu.memory_space<vmem>>, vector<128x128xf32>,
    return
  }
  func.func @transform_0(%arg0: i32) -> (i32, i32) {
    %c0_i32 = arith.constant 0 : i32
    %c0_i32_0 = arith.constant 0 : i32
    return %arg0, %c0_i32 : i32, i32
  }
  func.func @transform_1(%arg0: i32) -> (i32, i32) {
    %c0_i32 = arith.constant 0 : i32
    %c0_i32_0 = arith.constant 0 : i32
    %c0_i32_1 = arith.constant 0 : i32
    return %c0_i32, %c0_i32_0 : i32, i32
  }
  func.func @transform_2(%arg0: i32) -> (i32, i32) {
    %c0_i32 = arith.constant 0 : i32
    %c0_i32_0 = arith.constant 0 : i32
    %c0_i32_1 = arith.constant 0 : i32
    return %c0_i32, %c0_i32_0 : i32, i32
  }
  func.func @transform_3(%arg0: i32) -> (i32, i32) {
    %c0_i32 = arith.constant 0 : i32
    %c0_i32_0 = arith.constant 0 : i32
    %c0_i32_1 = arith.constant 0 : i32
    return %c0_i32, %c0_i32_0 : i32, i32
  }
  func.func @transform_4(%arg0: i32) -> (i32, i32) {
    %c0_i32 = arith.constant 0 : i32
    %c0_i32_0 = arith.constant 0 : i32
    %c0_i32_1 = arith.constant 0 : i32
    return %c0_i32, %c0_i32_0 : i32, i32
  }
  func.func @transform_5(%arg0: i32) -> (i32, i32) {
    %c0_i32 = arith.constant 0 : i32
    %c0_i32_0 = arith.constant 0 : i32
    %c0_i32_1 = arith.constant 0 : i32
    return %c0_i32, %c0_i32_0 : i32, i32
  }
  func.func @transform_6(%arg0: i32) -> (i32, i32) {
    %c0_i32 = arith.constant 0 : i32
    %c0_i32_0 = arith.constant 0 : i32
    %c0_i32_1 = arith.constant 0 : i32
    return %c0_i32, %c0_i32_0 : i32, i32
  }
  func.func @transform_7(%arg0: i32) -> (i32, i32) {
    %c0_i32 = arith.constant 0 : i32
    %c0_i32_0 = arith.constant 0 : i32
    return %arg0, %c0_i32 : i32, i32
  }
}

</mosaic_0001>

<llo_original>
// kernel: baseline_forward.1
$region0: #{baseline_forward.1}
  #allocation0 [shape = 'u32[]', space=smem, size = 0x4, offset = 0x4, fixed_abs, tag = 'smem constant byte address 0x4 - core index']
  #allocation1 [shape = 'u32[72,128]{1,0:T(1,128)}', space=vmem, size = 0x9000, scoped, tag = 'internal scratch']
  %s0 = inlined_call_operand.vmem [shape: bf16[128,64], index: 0, kind: input, shape index: {}]
  %s1 = inlined_call_operand.hbm [shape: bf16[64,128], index: 1, kind: input, shape index: {}]
  %s2 = inlined_call_operand.vmem [shape: f32[1,128], index: 2, kind: input, shape index: {}]
  %s3 = inlined_call_operand.vmem [shape: bf16[128,128], index: 3, kind: input, shape index: {}]
  %s4 = inlined_call_operand.vmem [shape: f32[1,128], index: 4, kind: input, shape index: {}]
  %s5 = inlined_call_operand.vmem [shape: bf16[128,128], index: 5, kind: input, shape index: {}]
  %s6 = inlined_call_operand.vmem [shape: f32[1,128], index: 6, kind: input, shape index: {}]
  %s7 = inlined_call_operand.vmem [shape: f32[128,128], index: 7, kind: output, shape index: {}]
  %s8 = sld [smem:[#allocation0]]
  $region42: #{baseline_forward.1} parent=0
    _
  %s10 = ssub.s32 1, %s8
  %s11 = scalar_select 0, %s10, %s8
  $region1: #{baseline_forward.1} parent=0
    #allocation2 [shape = 'u8[16384]{0}', space=vmem, size = 0x4000, scoped, tag = 'input window, operand 1, single buffered']
    #allocation3 [shape = 's32[1]{0}', space=sflag, size = 0x4, scoped, tag = 'scoped memory for baseline_forward.1']
    %12 = vsyncpa [#allocation3], 0
    // Predicated region
    $region2: #{baseline_forward.1} parent=1 // pred_check
      _
    $region3: #{baseline_forward.1} parent=1 // pred_check_branch
      %14 = sbr.rel (0) target = $region5
    $region4: #{baseline_forward.1} parent=1 // pred_region
      _
    $region5: #{baseline_forward.1} parent=1 // pred_fallthru
      _
    // Predicated region
    $region6: #{baseline_forward.1} parent=1 // pred_check
      _
    $region7: #{baseline_forward.1} parent=1 // pred_check_branch
      %16 = sbr.rel (0) target = $region9
    $region8: #{baseline_forward.1} parent=1 // pred_region
      %18 = vsyncadd [#allocation3], 0
      %s19 = sshll.u32 %s1, 4
      %s20 = int_to_ptr.hbm [resolvable:$true] %s19
      %s21 = sshll.u32 [#allocation2], 4
      %s22 = int_to_ptr.vmem [resolvable:$true] %s21
      %27 = dma.hbm_to_vmem [thread:$0]  %s20, 512, %s22, [#allocation3], 64, 64, 4
    $region9: #{baseline_forward.1} parent=1 // pred_fallthru
      _
    // Predicated region
    $region10: #{baseline_forward.1} parent=1 // pred_check
      _
    $region11: #{baseline_forward.1} parent=1 // pred_check_branch
      %29 = sbr.rel (0) target = $region13
    $region12: #{baseline_forward.1} parent=1 // pred_region
      _
    $region13: #{baseline_forward.1} parent=1 // pred_fallthru
      _
    // Predicated region
    $region14: #{baseline_forward.1} parent=1 // pred_check
      _
    $region15: #{baseline_forward.1} parent=1 // pred_check_branch
      %31 = sbr.rel (0) target = $region17
    $region16: #{baseline_forward.1} parent=1 // pred_region
      _
    $region17: #{baseline_forward.1} parent=1 // pred_fallthru
      _
    // Predicated region
    $region18: #{baseline_forward.1} parent=1 // pred_check
      _
    $region19: #{baseline_forward.1} parent=1 // pred_check_branch
      %33 = sbr.rel (0) target = $region21
    $region20: #{baseline_forward.1} parent=1 // pred_region
      _
    $region21: #{baseline_forward.1} parent=1 // pred_fallthru
      _
    // Predicated region
    $region22: #{baseline_forward.1} parent=1 // pred_check
      _
    $region23: #{baseline_forward.1} parent=1 // pred_check_branch
      %35 = sbr.rel (0) target = $region25
    $region24: #{baseline_forward.1} parent=1 // pred_region
      _
    $region25: #{baseline_forward.1} parent=1 // pred_fallthru
      _
    // Predicated region
    $region26: #{baseline_forward.1} parent=1 // pred_check
      _
    $region27: #{baseline_forward.1} parent=1 // pred_check_branch
      %37 = sbr.rel (0) target = $region29
    $region28: #{baseline_forward.1} parent=1 // pred_region
      _
    $region29: #{baseline_forward.1} parent=1 // pred_fallthru
      _
    // Predicated region
    $region30: #{baseline_forward.1} parent=1 // pred_check
      _
    $region31: #{baseline_forward.1} parent=1 // pred_check_branch
      %39 = sbr.rel (0) target = $region33
    $region32: #{baseline_forward.1} parent=1 // pred_region
      %41 = dma.done [#allocation3], 512
    $region33: #{baseline_forward.1} parent=1 // pred_fallthru
      _
    %v44 = vld [vmem:[%s2] sm:$0x1]
    %v45 = vld [vmem:[%s4] sm:$0x1]
    %v46 = vld [vmem:[%s6] sm:$0x1]
    %v47 = vld [vmem:[%s0] sm:$0xf]
    %v48 = vld [vmem:[%s0 + $0x4] sm:$0xf]
    %v49 = vld [vmem:[%s0 + $0x8] sm:$0xf]
    %v50 = vld [vmem:[%s0 + $0xc] sm:$0xf]
    %v51 = vld [vmem:[%s0 + $0x10] sm:$0xf]
    %v52 = vld [vmem:[%s0 + $0x14] sm:$0xf]
    %v53 = vld [vmem:[%s0 + $0x18] sm:$0xf]
    %v54 = vld [vmem:[%s0 + $0x1c] sm:$0xf]
    %v55 = vld [vmem:[%s0 + $0x20] sm:$0xf]
    %v56 = vld [vmem:[%s0 + $0x24] sm:$0xf]
    %v57 = vld [vmem:[%s0 + $0x28] sm:$0xf]
    %v58 = vld [vmem:[%s0 + $0x2c] sm:$0xf]
    %v59 = vld [vmem:[%s0 + $0x30] sm:$0xf]
    %v60 = vld [vmem:[%s0 + $0x34] sm:$0xf]
    %v61 = vld [vmem:[%s0 + $0x38] sm:$0xf]
    %v62 = vld [vmem:[%s0 + $0x3c] sm:$0xf]
    %v63 = vunpack.c.l.bf16 %v47
    %v64 = vunpack.c.l.bf16 %v48
    %v65 = vunpack.c.l.bf16 %v49
    %v66 = vunpack.c.l.bf16 %v50
    %v67 = vunpack.c.l.bf16 %v51
    %v68 = vunpack.c.l.bf16 %v52
    %v69 = vunpack.c.l.bf16 %v53
    %v70 = vunpack.c.l.bf16 %v54
    %v71 = vunpack.c.l.bf16 %v55
    %v72 = vunpack.c.l.bf16 %v56
    %v73 = vunpack.c.l.bf16 %v57
    %v74 = vunpack.c.l.bf16 %v58
    %v75 = vunpack.c.l.bf16 %v59
    %v76 = vunpack.c.l.bf16 %v60
    %v77 = vunpack.c.l.bf16 %v61
    %v78 = vunpack.c.l.bf16 %v62
    %v79 = vcvt.f32.s32.to.zero.pseudo %v63
    %v80 = vcvt.f32.s32.to.zero.pseudo %v64
    %v81 = vcvt.f32.s32.to.zero.pseudo %v65
    %v82 = vcvt.f32.s32.to.zero.pseudo %v66
    %v83 = vcvt.f32.s32.to.zero.pseudo %v67
    %v84 = vcvt.f32.s32.to.zero.pseudo %v68
    %v85 = vcvt.f32.s32.to.zero.pseudo %v69
    %v86 = vcvt.f32.s32.to.zero.pseudo %v70
    %v87 = vcvt.f32.s32.to.zero.pseudo %v71
    %v88 = vcvt.f32.s32.to.zero.pseudo %v72
    %v89 = vcvt.f32.s32.to.zero.pseudo %v73
    %v90 = vcvt.f32.s32.to.zero.pseudo %v74
    %v91 = vcvt.f32.s32.to.zero.pseudo %v75
    %v92 = vcvt.f32.s32.to.zero.pseudo %v76
    %v93 = vcvt.f32.s32.to.zero.pseudo %v77
    %v94 = vcvt.f32.s32.to.zero.pseudo %v78
    %v95 = vlaneseq
    %v96 = vand.u32 %v95, 127
    %v97 = vadd.s32 %v79, 32
    %v98 = vadd.s32 %v80, 32
    %v99 = vadd.s32 %v81, 32
    %v100 = vadd.s32 %v82, 32
    %v101 = vadd.s32 %v83, 32
    %v102 = vadd.s32 %v84, 32
    %v103 = vadd.s32 %v85, 32
    %v104 = vadd.s32 %v86, 32
    %v105 = vadd.s32 %v87, 32
    %v106 = vadd.s32 %v88, 32
    %v107 = vadd.s32 %v89, 32
    %v108 = vadd.s32 %v90, 32
    %v109 = vadd.s32 %v91, 32
    %v110 = vadd.s32 %v92, 32
    %v111 = vadd.s32 %v93, 32
    %v112 = vadd.s32 %v94, 32
    %113 = vset.pattern.permute.xlu0 31
    %114 = vperm.xlu0 %113, %v97
    %v115 = vpop.permute.xlu0 %114
    %116 = vset.pattern.permute.xlu0 31
    %117 = vperm.xlu0 %116, %v98
    %v118 = vpop.permute.xlu0 %117
    %119 = vset.pattern.permute.xlu0 31
    %120 = vperm.xlu0 %119, %v99
    %v121 = vpop.permute.xlu0 %120
    %122 = vset.pattern.permute.xlu0 31
    %123 = vperm.xlu0 %122, %v100
    %v124 = vpop.permute.xlu0 %123
    %125 = vset.pattern.permute.xlu0 31
    %126 = vperm.xlu0 %125, %v101
    %v127 = vpop.permute.xlu0 %126
    %128 = vset.pattern.permute.xlu0 31
    %129 = vperm.xlu0 %128, %v102
    %v130 = vpop.permute.xlu0 %129
    %131 = vset.pattern.permute.xlu0 31
    %132 = vperm.xlu0 %131, %v103
    %v133 = vpop.permute.xlu0 %132
    %134 = vset.pattern.permute.xlu0 31
    %135 = vperm.xlu0 %134, %v104
    %v136 = vpop.permute.xlu0 %135
    %137 = vset.pattern.permute.xlu0 31
    %138 = vperm.xlu0 %137, %v105
    %v139 = vpop.permute.xlu0 %138
    %140 = vset.pattern.permute.xlu0 31
    %141 = vperm.xlu0 %140, %v106
    %v142 = vpop.permute.xlu0 %141
    %143 = vset.pattern.permute.xlu0 31
    %144 = vperm.xlu0 %143, %v107
    %v145 = vpop.permute.xlu0 %144
    %146 = vset.pattern.permute.xlu0 31
    %147 = vperm.xlu0 %146, %v108
    %v148 = vpop.permute.xlu0 %147
    %149 = vset.pattern.permute.xlu0 31
    %150 = vperm.xlu0 %149, %v109
    %v151 = vpop.permute.xlu0 %150
    %152 = vset.pattern.permute.xlu0 31
    %153 = vperm.xlu0 %152, %v110
    %v154 = vpop.permute.xlu0 %153
    %155 = vset.pattern.permute.xlu0 31
    %156 = vperm.xlu0 %155, %v111
    %v157 = vpop.permute.xlu0 %156
    %158 = vset.pattern.permute.xlu0 31
    %159 = vperm.xlu0 %158, %v112
    %v160 = vpop.permute.xlu0 %159
    %vm161 = vcmp.eq.s32.totalorder %v96, %v115
    %vm162 = vcmp.eq.s32.totalorder %v96, %v118
    %vm163 = vcmp.eq.s32.totalorder %v96, %v121
    %vm164 = vcmp.eq.s32.totalorder %v96, %v124
    %vm165 = vcmp.eq.s32.totalorder %v96, %v127
    %vm166 = vcmp.eq.s32.totalorder %v96, %v130
    %vm167 = vcmp.eq.s32.totalorder %v96, %v133
    %vm168 = vcmp.eq.s32.totalorder %v96, %v136
    %vm169 = vcmp.eq.s32.totalorder %v96, %v139
    %vm170 = vcmp.eq.s32.totalorder %v96, %v142
    %vm171 = vcmp.eq.s32.totalorder %v96, %v145
    %vm172 = vcmp.eq.s32.totalorder %v96, %v148
    %vm173 = vcmp.eq.s32.totalorder %v96, %v151
    %vm174 = vcmp.eq.s32.totalorder %v96, %v154
    %vm175 = vcmp.eq.s32.totalorder %v96, %v157
    %vm176 = vcmp.eq.s32.totalorder %v96, %v160
    %vm177 = vmpackc.low %vm161, %vm161
    %vm178 = vmpackc.low %vm162, %vm162
    %vm179 = vmpackc.low %vm163, %vm163
    %vm180 = vmpackc.low %vm164, %vm164
    %vm181 = vmpackc.low %vm165, %vm165
    %vm182 = vmpackc.low %vm166, %vm166
    %vm183 = vmpackc.low %vm167, %vm167
    %vm184 = vmpackc.low %vm168, %vm168
    %vm185 = vmpackc.low %vm169, %vm169
    %vm186 = vmpackc.low %vm170, %vm170
    %vm187 = vmpackc.low %vm171, %vm171
    %vm188 = vmpackc.low %vm172, %vm172
    %vm189 = vmpackc.low %vm173, %vm173
    %vm190 = vmpackc.low %vm174, %vm174
    %vm191 = vmpackc.low %vm175, %vm175
    %vm192 = vmpackc.low %vm176, %vm176
    %v193 = vsel %vm177, 1065369472, %v47
    %v194 = vsel %vm178, 1065369472, %v48
    %v195 = vsel %vm179, 1065369472, %v49
    %v196 = vsel %vm180, 1065369472, %v50
    %v197 = vsel %vm181, 1065369472, %v51
    %v198 = vsel %vm182, 1065369472, %v52
    %v199 = vsel %vm183, 1065369472, %v53
    %v200 = vsel %vm184, 1065369472, %v54
    %v201 = vsel %vm185, 1065369472, %v55
    %v202 = vsel %vm186, 1065369472, %v56
    %v203 = vsel %vm187, 1065369472, %v57
    %v204 = vsel %vm188, 1065369472, %v58
    %v205 = vsel %vm189, 1065369472, %v59
    %v206 = vsel %vm190, 1065369472, %v60
    %v207 = vsel %vm191, 1065369472, %v61
    %v208 = vsel %vm192, 1065369472, %v62
    %v209 = vld [vmem:[#allocation2] sm:$0xf]
    %v210 = vld [vmem:[#allocation2 + $0x4] sm:$0xf]
    %v211 = vld [vmem:[#allocation2 + $0x8] sm:$0xf]
    %v212 = vld [vmem:[#allocation2 + $0xc] sm:$0xf]
    %v213 = vld [vmem:[#allocation2 + $0x10] sm:$0xf]
    %v214 = vld [vmem:[#allocation2 + $0x14] sm:$0xf]
    %v215 = vld [vmem:[#allocation2 + $0x18] sm:$0xf]
    %v216 = vld [vmem:[#allocation2 + $0x1c] sm:$0xf]
    %v218 = vperm.slane %v44, 0
    %v236 = vunpack.c.l.b16 %v193
    %v237 = vunpack.c.l.b16 %v194
    %v238 = vunpack.c.l.b16 %v195
    %v239 = vunpack.c.l.b16 %v196
    %v240 = vunpack.c.l.b16 %v197
    %v241 = vunpack.c.l.b16 %v198
    %v242 = vunpack.c.l.b16 %v199
    %v243 = vunpack.c.l.b16 %v200
    %v244 = vunpack.c.l.b16 %v201
    %v245 = vunpack.c.l.b16 %v202
    %v246 = vunpack.c.l.b16 %v203
    %v247 = vunpack.c.l.b16 %v204
    %v248 = vunpack.c.l.b16 %v205
    %v249 = vunpack.c.l.b16 %v206
    %v250 = vunpack.c.l.b16 %v207
    %v251 = vunpack.c.l.b16 %v208
    %v252 = vpack.c.b16 %v237, %v236
    %v253 = vpack.c.b16 %v239, %v238
    %v254 = vpack.c.b16 %v241, %v240
    %v255 = vpack.c.b16 %v243, %v242
    %v256 = vpack.c.b16 %v245, %v244
    %v257 = vpack.c.b16 %v247, %v246
    %v258 = vpack.c.b16 %v249, %v248
    %v259 = vpack.c.b16 %v251, %v250
    %v268 = vunpack.c.l.b16 %v209
    %v269 = vunpack.c.l.b16 %v210
    %v270 = vunpack.c.l.b16 %v211
    %v271 = vunpack.c.l.b16 %v212
    %v272 = vunpack.c.l.b16 %v213
    %v273 = vunpack.c.l.b16 %v214
    %v274 = vunpack.c.l.b16 %v215
    %v275 = vunpack.c.l.b16 %v216
    %v276 = vpack.c.b16 %v269, %v268
    %v277 = vpack.c.b16 %v271, %v270
    %v278 = vpack.c.b16 %v273, %v272
    %v279 = vpack.c.b16 %v275, %v274
    %vm284 = vcmask 523264
    %v286 = vsel %vm284, %v252, 0
    %v289 = vsel %vm284, %v253, 0
    %v292 = vsel %vm284, %v254, 0
    %v295 = vsel %vm284, %v255, 0
    %v298 = vsel %vm284, %v256, 0
    %v301 = vsel %vm284, %v257, 0
    %v304 = vsel %vm284, %v258, 0
    %v307 = vsel %vm284, %v259, 0
    %309 = vmatpush.bf16.msra.mxu0 0
    %310 = vmatpush.bf16.msra.mxu0 0
    %311 = vmatpush.bf16.msra.mxu0 0
    %312 = vmatpush.bf16.msra.mxu0 0
    %313 = vmatpush.bf16.msra.mxu0 %v279
    %314 = vmatpush.bf16.msra.mxu0 %v278
    %315 = vmatpush.bf16.msra.mxu0 %v277
    %316 = vmatpush.bf16.msra.mxu0 %v276
    %317 = vmatmul.bf16.gmra.mxu0 %v286
    %v318 = vpop.f32.mrf.mxu0
    %v319 = vadd.f32 %v218, %v318
    %v320 = vpop.f32.mrf.mxu0
    %v321 = vadd.f32 %v218, %v320
    %322 = vmatmul.bf16.gmra.mxu0 %v289
    %v323 = vpop.f32.mrf.mxu0
    %v324 = vadd.f32 %v218, %v323
    %v325 = vpop.f32.mrf.mxu0
    %v326 = vadd.f32 %v218, %v325
    %327 = vmatmul.bf16.gmra.mxu0 %v292
    %v328 = vpop.f32.mrf.mxu0
    %v329 = vadd.f32 %v218, %v328
    %v330 = vpop.f32.mrf.mxu0
    %v331 = vadd.f32 %v218, %v330
    %332 = vmatmul.bf16.gmra.mxu0 %v295
    %v333 = vpop.f32.mrf.mxu0
    %v334 = vadd.f32 %v218, %v333
    %v335 = vpop.f32.mrf.mxu0
    %v336 = vadd.f32 %v218, %v335
    %337 = vmatmul.bf16.gmra.mxu0 %v298
    %v338 = vpop.f32.mrf.mxu0
    %v339 = vadd.f32 %v218, %v338
    %v340 = vpop.f32.mrf.mxu0
    %v341 = vadd.f32 %v218, %v340
    %342 = vmatmul.bf16.gmra.mxu0 %v301
    %v343 = vpop.f32.mrf.mxu0
    %v344 = vadd.f32 %v218, %v343
    %v345 = vpop.f32.mrf.mxu0
    %v346 = vadd.f32 %v218, %v345
    %347 = vmatmul.bf16.gmra.mxu0 %v304
    %v348 = vpop.f32.mrf.mxu0
    %v349 = vadd.f32 %v218, %v348
    %v350 = vpop.f32.mrf.mxu0
    %v351 = vadd.f32 %v218, %v350
    %352 = vmatmul.bf16.gmra.mxu0 %v307
    %v353 = vpop.f32.mrf.mxu0
    %v354 = vadd.f32 %v218, %v353
    %v355 = vpop.f32.mrf.mxu0
    %v356 = vadd.f32 %v218, %v355
    %357 = vdwg.mxu0
    %v358 = vpack.c.bf16 %v321, %v319
    %v359 = vpack.c.bf16 %v326, %v324
    %v360 = vpack.c.bf16 %v331, %v329
    %v361 = vpack.c.bf16 %v336, %v334
    %v362 = vpack.c.bf16 %v341, %v339
    %v363 = vpack.c.bf16 %v346, %v344
    %v364 = vpack.c.bf16 %v351, %v349
    %v365 = vpack.c.bf16 %v356, %v354
    %v366 = vld [vmem:[%s3] sm:$0xf]
    %v367 = vld [vmem:[%s3 + $0x4] sm:$0xf]
    %v368 = vld [vmem:[%s3 + $0x8] sm:$0xf]
    %v369 = vld [vmem:[%s3 + $0xc] sm:$0xf]
    %v370 = vld [vmem:[%s3 + $0x10] sm:$0xf]
    %v371 = vld [vmem:[%s3 + $0x14] sm:$0xf]
    %v372 = vld [vmem:[%s3 + $0x18] sm:$0xf]
    %v373 = vld [vmem:[%s3 + $0x1c] sm:$0xf]
    %v374 = vld [vmem:[%s3 + $0x20] sm:$0xf]
    %v375 = vld [vmem:[%s3 + $0x24] sm:$0xf]
    %v376 = vld [vmem:[%s3 + $0x28] sm:$0xf]
    %v377 = vld [vmem:[%s3 + $0x2c] sm:$0xf]
    %v378 = vld [vmem:[%s3 + $0x30] sm:$0xf]
    %v379 = vld [vmem:[%s3 + $0x34] sm:$0xf]
    %v380 = vld [vmem:[%s3 + $0x38] sm:$0xf]
    %v381 = vld [vmem:[%s3 + $0x3c] sm:$0xf]
    %v383 = vperm.slane %v45, 0
    %v401 = vunpack.c.l.b16 %v366
    %v402 = vunpack.c.l.b16 %v367
    %v403 = vunpack.c.l.b16 %v368
    %v404 = vunpack.c.l.b16 %v369
    %v405 = vunpack.c.l.b16 %v370
    %v406 = vunpack.c.l.b16 %v371
    %v407 = vunpack.c.l.b16 %v372
    %v408 = vunpack.c.l.b16 %v373
    %v409 = vunpack.c.l.b16 %v374
    %v410 = vunpack.c.l.b16 %v375
    %v411 = vunpack.c.l.b16 %v376
    %v412 = vunpack.c.l.b16 %v377
    %v413 = vunpack.c.l.b16 %v378
    %v414 = vunpack.c.l.b16 %v379
    %v415 = vunpack.c.l.b16 %v380
    %v416 = vunpack.c.l.b16 %v381
    %v417 = vpack.c.b16 %v402, %v401
    %v418 = vpack.c.b16 %v404, %v403
    %v419 = vpack.c.b16 %v406, %v405
    %v420 = vpack.c.b16 %v408, %v407
    %v421 = vpack.c.b16 %v410, %v409
    %v422 = vpack.c.b16 %v412, %v411
    %v423 = vpack.c.b16 %v414, %v413
    %v424 = vpack.c.b16 %v416, %v415
    %433 = vmatpush.bf16.msra.mxu0 %v424
    %434 = vmatpush.bf16.msra.mxu0 %v423
    %435 = vmatpush.bf16.msra.mxu0 %v422
    %436 = vmatpush.bf16.msra.mxu0 %v421
    %437 = vmatpush.bf16.msra.mxu0 %v420
    %438 = vmatpush.bf16.msra.mxu0 %v419
    %439 = vmatpush.bf16.msra.mxu0 %v418
    %440 = vmatpush.bf16.msra.mxu0 %v417
    %441 = vmatmul.bf16.gmra.mxu0 %v358
    %v442 = vpop.f32.mrf.mxu0
    %v443 = vadd.f32 %v383, %v442
    %v444 = vpop.f32.mrf.mxu0
    %v445 = vadd.f32 %v383, %v444
    %446 = vmatmul.bf16.gmra.mxu0 %v359
    %v447 = vpop.f32.mrf.mxu0
    %v448 = vadd.f32 %v383, %v447
    %v449 = vpop.f32.mrf.mxu0
    %v450 = vadd.f32 %v383, %v449
    %451 = vmatmul.bf16.gmra.mxu0 %v360
    %v452 = vpop.f32.mrf.mxu0
    %v453 = vadd.f32 %v383, %v452
    %v454 = vpop.f32.mrf.mxu0
    %v455 = vadd.f32 %v383, %v454
    %456 = vmatmul.bf16.gmra.mxu0 %v361
    %v457 = vpop.f32.mrf.mxu0
    %v458 = vadd.f32 %v383, %v457
    %v459 = vpop.f32.mrf.mxu0
    %v460 = vadd.f32 %v383, %v459
    %461 = vmatmul.bf16.gmra.mxu0 %v362
    %v462 = vpop.f32.mrf.mxu0
    %v463 = vadd.f32 %v383, %v462
    %v464 = vpop.f32.mrf.mxu0
    %v465 = vadd.f32 %v383, %v464
    %466 = vmatmul.bf16.gmra.mxu0 %v363
    %v467 = vpop.f32.mrf.mxu0
    %v468 = vadd.f32 %v383, %v467
    %v469 = vpop.f32.mrf.mxu0
    %v470 = vadd.f32 %v383, %v469
    %471 = vmatmul.bf16.gmra.mxu0 %v364
    %v472 = vpop.f32.mrf.mxu0
    %v473 = vadd.f32 %v383, %v472
    %v474 = vpop.f32.mrf.mxu0
    %v475 = vadd.f32 %v383, %v474
    %476 = vmatmul.bf16.gmra.mxu0 %v365
    %v477 = vpop.f32.mrf.mxu0
    %v478 = vadd.f32 %v383, %v477
    %v479 = vpop.f32.mrf.mxu0
    %v480 = vadd.f32 %v383, %v479
    %481 = vdwg.mxu0
    %v482 = vmax.f32 %v443, 0.0
    %v483 = vmax.f32 %v445, 0.0
    %v484 = vmax.f32 %v448, 0.0
    %v485 = vmax.f32 %v450, 0.0
    %v486 = vmax.f32 %v453, 0.0
    %v487 = vmax.f32 %v455, 0.0
    %v488 = vmax.f32 %v458, 0.0
    %v489 = vmax.f32 %v460, 0.0
    %v490 = vmax.f32 %v463, 0.0
    %v491 = vmax.f32 %v465, 0.0
    %v492 = vmax.f32 %v468, 0.0
    %v493 = vmax.f32 %v470, 0.0
    %v494 = vmax.f32 %v473, 0.0
    %v495 = vmax.f32 %v475, 0.0
    %v496 = vmax.f32 %v478, 0.0
    %v497 = vmax.f32 %v480, 0.0
    %v498 = vpack.c.bf16 %v483, %v482
    %v499 = vpack.c.bf16 %v485, %v484
    %v500 = vpack.c.bf16 %v487, %v486
    %v501 = vpack.c.bf16 %v489, %v488
    %v502 = vpack.c.bf16 %v491, %v490
    %v503 = vpack.c.bf16 %v493, %v492
    %v504 = vpack.c.bf16 %v495, %v494
    %v505 = vpack.c.bf16 %v497, %v496
    %506 = vmatpush.bf16.msra.mxu0 %v424
    %507 = vmatpush.bf16.msra.mxu0 %v423
    %508 = vmatpush.bf16.msra.mxu0 %v422
    %509 = vmatpush.bf16.msra.mxu0 %v421
    %510 = vmatpush.bf16.msra.mxu0 %v420
    %511 = vmatpush.bf16.msra.mxu0 %v419
    %512 = vmatpush.bf16.msra.mxu0 %v418
    %513 = vmatpush.bf16.msra.mxu0 %v417
    %514 = vmatmul.bf16.gmra.mxu0 %v498
    %v515 = vpop.f32.mrf.mxu0
    %v516 = vadd.f32 %v383, %v515
    %v517 = vpop.f32.mrf.mxu0
    %v518 = vadd.f32 %v383, %v517
    %519 = vmatmul.bf16.gmra.mxu0 %v499
    %v520 = vpop.f32.mrf.mxu0
    %v521 = vadd.f32 %v383, %v520
    %v522 = vpop.f32.mrf.mxu0
    %v523 = vadd.f32 %v383, %v522
    %524 = vmatmul.bf16.gmra.mxu0 %v500
    %v525 = vpop.f32.mrf.mxu0
    %v526 = vadd.f32 %v383, %v525
    %v527 = vpop.f32.mrf.mxu0
    %v528 = vadd.f32 %v383, %v527
    %529 = vmatmul.bf16.gmra.mxu0 %v501
    %v530 = vpop.f32.mrf.mxu0
    %v531 = vadd.f32 %v383, %v530
    %v532 = vpop.f32.mrf.mxu0
    %v533 = vadd.f32 %v383, %v532
    %534 = vmatmul.bf16.gmra.mxu0 %v502
    %v535 = vpop.f32.mrf.mxu0
    %v536 = vadd.f32 %v383, %v535
    %v537 = vpop.f32.mrf.mxu0
    %v538 = vadd.f32 %v383, %v537
    %539 = vmatmul.bf16.gmra.mxu0 %v503
    %v540 = vpop.f32.mrf.mxu0
    %v541 = vadd.f32 %v383, %v540
    %v542 = vpop.f32.mrf.mxu0
    %v543 = vadd.f32 %v383, %v542
    %544 = vmatmul.bf16.gmra.mxu0 %v504
    %v545 = vpop.f32.mrf.mxu0
    %v546 = vadd.f32 %v383, %v545
    %v547 = vpop.f32.mrf.mxu0
    %v548 = vadd.f32 %v383, %v547
    %549 = vmatmul.bf16.gmra.mxu0 %v505
    %v550 = vpop.f32.mrf.mxu0
    %v551 = vadd.f32 %v383, %v550
    %v552 = vpop.f32.mrf.mxu0
    %v553 = vadd.f32 %v383, %v552
    %554 = vdwg.mxu0
    %v555 = vmax.f32 %v516, 0.0
    %v556 = vmax.f32 %v518, 0.0
    %v557 = vmax.f32 %v521, 0.0
    %v558 = vmax.f32 %v523, 0.0
    %v559 = vmax.f32 %v526, 0.0
    %v560 = vmax.f32 %v528, 0.0
    %v561 = vmax.f32 %v531, 0.0
    %v562 = vmax.f32 %v533, 0.0
    %v563 = vmax.f32 %v536, 0.0
    %v564 = vmax.f32 %v538, 0.0
    %v565 = vmax.f32 %v541, 0.0
    %v566 = vmax.f32 %v543, 0.0
    %v567 = vmax.f32 %v546, 0.0
    %v568 = vmax.f32 %v548, 0.0
    %v569 = vmax.f32 %v551, 0.0
    %v570 = vmax.f32 %v553, 0.0
    %v571 = vpack.c.bf16 %v556, %v555
    %v572 = vpack.c.bf16 %v558, %v557
    %v573 = vpack.c.bf16 %v560, %v559
    %v574 = vpack.c.bf16 %v562, %v561
    %v575 = vpack.c.bf16 %v564, %v563
    %v576 = vpack.c.bf16 %v566, %v565
    %v577 = vpack.c.bf16 %v568, %v567
    %v578 = vpack.c.bf16 %v570, %v569
    %v579 = vld [vmem:[%s5] sm:$0xf]
    %v580 = vld [vmem:[%s5 + $0x4] sm:$0xf]
    %v581 = vld [vmem:[%s5 + $0x8] sm:$0xf]
    %v582 = vld [vmem:[%s5 + $0xc] sm:$0xf]
    %v583 = vld [vmem:[%s5 + $0x10] sm:$0xf]
    %v584 = vld [vmem:[%s5 + $0x14] sm:$0xf]
    %v585 = vld [vmem:[%s5 + $0x18] sm:$0xf]
    %v586 = vld [vmem:[%s5 + $0x1c] sm:$0xf]
    %v587 = vld [vmem:[%s5 + $0x20] sm:$0xf]
    %v588 = vld [vmem:[%s5 + $0x24] sm:$0xf]
    %v589 = vld [vmem:[%s5 + $0x28] sm:$0xf]
    %v590 = vld [vmem:[%s5 + $0x2c] sm:$0xf]
    %v591 = vld [vmem:[%s5 + $0x30] sm:$0xf]
    %v592 = vld [vmem:[%s5 + $0x34] sm:$0xf]
    %v593 = vld [vmem:[%s5 + $0x38] sm:$0xf]
    %v594 = vld [vmem:[%s5 + $0x3c] sm:$0xf]
    %v596 = vperm.slane %v46, 0
    %v614 = vunpack.c.l.b16 %v579
    %v615 = vunpack.c.l.b16 %v580
    %v616 = vunpack.c.l.b16 %v581
    %v617 = vunpack.c.l.b16 %v582
    %v618 = vunpack.c.l.b16 %v583
    %v619 = vunpack.c.l.b16 %v584
    %v620 = vunpack.c.l.b16 %v585
    %v621 = vunpack.c.l.b16 %v586
    %v622 = vunpack.c.l.b16 %v587
    %v623 = vunpack.c.l.b16 %v588
    %v624 = vunpack.c.l.b16 %v589
    %v625 = vunpack.c.l.b16 %v590
    %v626 = vunpack.c.l.b16 %v591
    %v627 = vunpack.c.l.b16 %v592
    %v628 = vunpack.c.l.b16 %v593
    %v629 = vunpack.c.l.b16 %v594
    %v630 = vpack.c.b16 %v615, %v614
    %v631 = vpack.c.b16 %v617, %v616
    %v632 = vpack.c.b16 %v619, %v618
    %v633 = vpack.c.b16 %v621, %v620
    %v634 = vpack.c.b16 %v623, %v622
    %v635 = vpack.c.b16 %v625, %v624
    %v636 = vpack.c.b16 %v627, %v626
    %v637 = vpack.c.b16 %v629, %v628
    %646 = vmatpush.bf16.msra.mxu0 %v637
    %647 = vmatpush.bf16.msra.mxu0 %v636
    %648 = vmatpush.bf16.msra.mxu0 %v635
    %649 = vmatpush.bf16.msra.mxu0 %v634
    %650 = vmatpush.bf16.msra.mxu0 %v633
    %651 = vmatpush.bf16.msra.mxu0 %v632
    %652 = vmatpush.bf16.msra.mxu0 %v631
    %653 = vmatpush.bf16.msra.mxu0 %v630
    %654 = vmatmul.bf16.gmra.mxu0 %v571
    %v655 = vpop.f32.mrf.mxu0
    %v656 = vadd.f32 %v596, %v655
    %v657 = vpop.f32.mrf.mxu0
    %v658 = vadd.f32 %v596, %v657
    %659 = vmatmul.bf16.gmra.mxu0 %v572
    %v660 = vpop.f32.mrf.mxu0
    %v661 = vadd.f32 %v596, %v660
    %v662 = vpop.f32.mrf.mxu0
    %v663 = vadd.f32 %v596, %v662
    %664 = vmatmul.bf16.gmra.mxu0 %v573
    %v665 = vpop.f32.mrf.mxu0
    %v666 = vadd.f32 %v596, %v665
    %v667 = vpop.f32.mrf.mxu0
    %v668 = vadd.f32 %v596, %v667
    %669 = vmatmul.bf16.gmra.mxu0 %v574
    %v670 = vpop.f32.mrf.mxu0
    %v671 = vadd.f32 %v596, %v670
    %v672 = vpop.f32.mrf.mxu0
    %v673 = vadd.f32 %v596, %v672
    %674 = vmatmul.bf16.gmra.mxu0 %v575
    %v675 = vpop.f32.mrf.mxu0
    %v676 = vadd.f32 %v596, %v675
    %v677 = vpop.f32.mrf.mxu0
    %v678 = vadd.f32 %v596, %v677
    %679 = vmatmul.bf16.gmra.mxu0 %v576
    %v680 = vpop.f32.mrf.mxu0
    %v681 = vadd.f32 %v596, %v680
    %v682 = vpop.f32.mrf.mxu0
    %v683 = vadd.f32 %v596, %v682
    %684 = vmatmul.bf16.gmra.mxu0 %v577
    %v685 = vpop.f32.mrf.mxu0
    %v686 = vadd.f32 %v596, %v685
    %v687 = vpop.f32.mrf.mxu0
    %v688 = vadd.f32 %v596, %v687
    %689 = vmatmul.bf16.gmra.mxu0 %v578
    %v690 = vpop.f32.mrf.mxu0
    %v691 = vadd.f32 %v596, %v690
    %v692 = vpop.f32.mrf.mxu0
    %v693 = vadd.f32 %v596, %v692
    %694 = vdwg.mxu0
    %695 = vst [vmem:[%s7] sm:$0xff] %v656
    %696 = vst [vmem:[%s7 + $0x8] sm:$0xff] %v658
    %697 = vst [vmem:[%s7 + $0x10] sm:$0xff] %v661
    %698 = vst [vmem:[%s7 + $0x18] sm:$0xff] %v663
    %699 = vst [vmem:[%s7 + $0x20] sm:$0xff] %v666
    %700 = vst [vmem:[%s7 + $0x28] sm:$0xff] %v668
    %701 = vst [vmem:[%s7 + $0x30] sm:$0xff] %v671
    %702 = vst [vmem:[%s7 + $0x38] sm:$0xff] %v673
    %703 = vst [vmem:[%s7 + $0x40] sm:$0xff] %v676
    %704 = vst [vmem:[%s7 + $0x48] sm:$0xff] %v678
    %705 = vst [vmem:[%s7 + $0x50] sm:$0xff] %v681
    %706 = vst [vmem:[%s7 + $0x58] sm:$0xff] %v683
    %707 = vst [vmem:[%s7 + $0x60] sm:$0xff] %v686
    %708 = vst [vmem:[%s7 + $0x68] sm:$0xff] %v688
    %709 = vst [vmem:[%s7 + $0x70] sm:$0xff] %v691
    %710 = vst [vmem:[%s7 + $0x78] sm:$0xff] %v693
    // Predicated region
    $region34: #{baseline_forward.1} parent=1 // pred_check
      _
    $region35: #{baseline_forward.1} parent=1 // pred_check_branch
      %712 = sbr.rel (0) target = $region37
    $region36: #{baseline_forward.1} parent=1 // pred_region
      _
    $region37: #{baseline_forward.1} parent=1 // pred_fallthru
      _
    // Predicated region
    $region38: #{baseline_forward.1} parent=1 // pred_check
      _
    $region39: #{baseline_forward.1} parent=1 // pred_check_branch
      %714 = sbr.rel (0) target = $region41
    $region40: #{baseline_forward.1} parent=1 // pred_region
      _
    $region41: #{baseline_forward.1} parent=1 // pred_fallthru
      _
    %715 = vsyncpa [#allocation3], 1

</llo_original>
